<compile_context>
chip_gen: v7x
topology: tpu7x:2x2x1
jax: 0.10.0
libtpu: 0.0.40
codegen_flags: <defaults>
</compile_context>

<pallas_src>
import math

import jax
import jax.numpy as jnp
from jax.experimental import pallas as pl
from jax.experimental.pallas import tpu as pltpu


# --------------------------------------------------------------------------- #
# Helpers
# --------------------------------------------------------------------------- #

def _cdiv(a: int, b: int) -> int:
    return -(-a // b)


# Native sublane packing per element size: 8 rows (f32), 16 (bf16/f16), 32 (int8/fp8).
_SUBLANE_PACK = {1: 32, 2: 16, 4: 8, 8: 8}

_MAX_DMA_CHUNKS = 4  # 2-4 DMAs in flight engage multiple DMA queues.


def _lane_dense_factorization(total: int):
    """Pick (rows, cols) with cols a multiple of 128 — largest factor first
    (longer contiguous rows per DMA descriptor, fewer store iterations)."""
    for cols in (2048, 1024, 512, 256, 128):
        if total % cols == 0:
            return total // cols, cols
    return None


def _tile_budget():
    """Per-generation (target_tile_bytes, vmem_limit_bytes) for the tiled copy.

    v6e/v7x: ~3.2 / 1.4 TB/s HBM makes the ~0.35 us per-step overhead large at
    2 MiB, so use ~6 MiB tiles (double-buffered in+out = 24 MiB, fits v7x's
    64 MiB physical VMEM).  v5e (~820 GB/s, 16 MiB scoped default) and older
    parts stay at 2 MiB.
    """
    kind = ""
    try:
        kind = jax.devices()[0].device_kind.lower()
    except Exception:  # pragma: no cover - defensive
        pass
    if any(tag in kind for tag in ("v2", "v3", "v5e", "v5 lite", "v5lite")):
        tile_bytes = 2 << 20
    else:
        tile_bytes = 6 << 20
    vmem_limit = min(8 * tile_bytes, 100 << 20)  # in+out, double buffered, headroom
    return tile_bytes, vmem_limit


def _choose_tile_rows(rows: int, cols: int, itemsize: int,
                      target_tile_bytes: int, total_bytes: int) -> int:
    """Row-tile size: near the byte target, multiple of the sublane packing,
    at least 4 tiles for mid/large arrays, bounded even-division search."""
    pack = _SUBLANE_PACK.get(itemsize, 8)
    row_bytes = cols * itemsize
    max_rows = max(pack, (target_tile_bytes // row_bytes) // pack * pack)

    # >= ~4 MiB arrays: force at least 4 tiles so DMA-in / copy / DMA-out
    # overlap and both v7x TensorCores share the "parallel" grid axis.
    min_tiles = 4 if total_bytes >= (4 << 20) else 1
    n_tiles = max(_cdiv(rows, max_rows), min_tiles)
    if n_tiles <= 1 or rows <= pack:
        return rows  # single full-dims block (always layout-legal)

    tile_rows = min(max_rows, _cdiv(_cdiv(rows, n_tiles), pack) * pack)
    if tile_rows >= rows:
        return rows

    # Bounded even-division search: only accept a divisor >= half the target
    # tile.  A ragged, masked tail block is far cheaper than tiny tiles.
    t = tile_rows
    lower = max(pack, tile_rows // 2)
    while t >= lower:
        if rows % t == 0:
            return t
        t -= pack
    return tile_rows


# --------------------------------------------------------------------------- #
# Kernel 1: chunked HBM -> HBM DMA copy (no VMEM staging)
# --------------------------------------------------------------------------- #

def _make_hbm_dma_copy_kernel(chunks, ndim):
    """Issue one DMA per chunk (all in flight), then wait on all of them."""
    def kernel(x_hbm, o_hbm, sems):
        copies = []
        for c, (start, size) in enumerate(chunks):
            idx = (pl.ds(start, size),) + (slice(None),) * (ndim - 1)
            cp = pltpu.make_async_copy(x_hbm.at[idx], o_hbm.at[idx], sems.at[c])
            cp.start()
            copies.append(cp)
        for cp in copies:
            cp.wait()
    return kernel


def _hbm_dma_copy(x: jax.Array) -> jax.Array:
    orig_shape = x.shape
    total = int(math.prod(orig_shape)) if orig_shape else 1
    if total == 0:
        return x
    itemsize = jnp.dtype(x.dtype).itemsize

    # Lane-dense 2-D view when possible (nicer descriptors); otherwise copy as-is.
    factored = _lane_dense_factorization(total)
    if factored is not None:
        arr = x.reshape(factored)
    elif x.ndim == 0:
        arr = x.reshape(1)
    else:
        arr = x

    lead = arr.shape[0]
    bytes_total = total * itemsize
    n_chunks = min(_MAX_DMA_CHUNKS, lead, max(1, bytes_total // (1 << 20)))

    chunks = []
    base, rem, start = lead // n_chunks, lead % n_chunks, 0
    for c in range(n_chunks):
        size = base + (1 if c < rem else 0)
        chunks.append((start, size))
        start += size

    y = pl.pallas_call(
        _make_hbm_dma_copy_kernel(tuple(chunks), arr.ndim),
        out_shape=jax.ShapeDtypeStruct(arr.shape, arr.dtype),
        in_specs=[pl.BlockSpec(memory_space=pl.ANY)],
        out_specs=pl.BlockSpec(memory_space=pl.ANY),
        scratch_shapes=[pltpu.SemaphoreType.DMA((len(chunks),))],
    )(arr)
    return y.reshape(orig_shape)


# --------------------------------------------------------------------------- #
# Kernel 2: tiled lane-dense VMEM copy (supports input/output aliasing)
# --------------------------------------------------------------------------- #

def _copy_kernel(x_ref, o_ref):
    o_ref[...] = x_ref[...]


def _tiled_vmem_copy(x: jax.Array, *, donate: bool = False) -> jax.Array:
    orig_shape = x.shape
    total = int(math.prod(orig_shape)) if orig_shape else 1
    if total == 0 or x.ndim == 0:
        return x

    factored = _lane_dense_factorization(total)
    if factored is None:
        # Element count not a multiple of 128: the DMA copy has no lane/layout
        # constraints and never double-buffers the whole array in VMEM.
        # (Aliasing is skipped for this rare shape class.)
        return _hbm_dma_copy(x)

    rows, cols = factored
    itemsize = jnp.dtype(x.dtype).itemsize
    target_tile_bytes, vmem_limit = _tile_budget()
    tile_rows = _choose_tile_rows(rows, cols, itemsize,
                                  target_tile_bytes, total * itemsize)
    grid = (_cdiv(rows, tile_rows),)

    extra = {"input_output_aliases": {0: 0}} if donate else {}

    x2d = x.reshape(rows, cols)
    y2d = pl.pallas_call(
        _copy_kernel,
        out_shape=jax.ShapeDtypeStruct((rows, cols), x.dtype),
        grid=grid,
        in_specs=[pl.BlockSpec((tile_rows, cols), lambda i: (i, 0))],
        out_specs=pl.BlockSpec((tile_rows, cols), lambda i: (i, 0)),
        compiler_params=pltpu.CompilerParams(
            dimension_semantics=("parallel",),
            vmem_limit_bytes=vmem_limit,
        ),
        **extra,
    )(x2d)
    return y2d.reshape(orig_shape)


# --------------------------------------------------------------------------- #
# Public API (forward-pass semantics of IdentityFirstStage)
# --------------------------------------------------------------------------- #

def identity_first_stage_copy(x: jax.Array, *, donate: bool = False,
                              method: str = "dma") -> jax.Array:
    """Materialized identity copy.

    method="dma"  : chunked HBM->HBM DMA copy (default, no VMEM round trip).
    method="tiled": lane-dense tiled VMEM copy.
    donate=True   : use the tiled kernel with input_output_aliases={0: 0} so a
                    donated input buffer is reused in place.
    """
    if int(math.prod(x.shape)) == 0 or x.ndim == 0:
        # Nothing to tile/copy (empty or scalar); identity result is the input.
        return x
    if donate or method == "tiled":
        return _tiled_vmem_copy(x, donate=donate)
    return _hbm_dma_copy(x)


def identity_first_stage_forward(x: jax.Array) -> jax.Array:
    """forward(x) == x. True identity: no kernel, no HBM traffic."""
    return x


def encode(x: jax.Array) -> jax.Array:
    return x


def decode(x: jax.Array) -> jax.Array:
    return x


def quantize(x: jax.Array, vq_interface: bool = False):
    if vq_interface:
        return (x, None, [None, None, None])
    return x


# --------------------------------------------------------------------------- #
# Smoke test
# --------------------------------------------------------------------------- #

if __name__ == "__main__":
    # IdentityFirstStage has no parameters; nothing to initialize.
    key = jax.random.PRNGKey(0)
    x = jax.random.normal(key, (2, 4, 16, 16), dtype=jnp.float32)  # NCHW latents

    # Forward / encode / decode / quantize: pure identity (zero-copy fast path).
    y = identity_first_stage_forward(x)
    assert y is x
    assert encode(x) is x and decode(x) is x
    assert quantize(x) is x
    q = quantize(x, vq_interface=True)
    assert q[0] is x and q[1] is None and q[2] == [None, None, None]

    # Materialized copy via chunked HBM->HBM DMA (default path).
    y_dma = jax.block_until_ready(identity_first_stage_copy(x))
    assert y_dma.shape == x.shape and y_dma.dtype == x.dtype
    assert bool(jnp.array_equal(y_dma, x))

    # Materialized copy via the tiled lane-dense VMEM kernel.
    y_tiled = jax.block_until_ready(identity_first_stage_copy(x, method="tiled"))
    assert bool(jnp.array_equal(y_tiled, x))

    # Donating variant: same tiled kernel, input_output_aliases={0: 0}.
    donating_copy = jax.jit(lambda a: identity_first_stage_copy(a, donate=True),
                            donate_argnums=0)
    x_clone = x + 0.0  # a separate buffer we are allowed to donate
    y_alias = jax.block_until_ready(donating_copy(x_clone))
    assert bool(jnp.array_equal(y_alias, x))

    # Robustness: element count not a multiple of 128 (DMA path, no reshape).
    x_odd = jax.random.normal(jax.random.PRNGKey(1), (3, 5, 7), dtype=jnp.float32)
    y_odd = jax.block_until_ready(identity_first_stage_copy(x_odd))
    assert bool(jnp.array_equal(y_odd, x_odd))

    # bf16 latents exercise the 16-row sublane-packing alignment on the tiled path.
    x_bf16 = jax.random.normal(jax.random.PRNGKey(2), (2, 8, 32, 32)).astype(jnp.bfloat16)
    y_bf16 = jax.block_until_ready(identity_first_stage_copy(x_bf16, method="tiled"))
    assert bool(jnp.array_equal(y_bf16, x_bf16))

    # Empty input: early return, no kernel.
    x_empty = jnp.zeros((0, 4, 16, 16), jnp.float32)
    assert identity_first_stage_copy(x_empty) is x_empty

    print("KERNEL_OK")
</pallas_src>

<mosaic_0001>
module attributes {stable_mosaic.version = 11 : i64} {
  func.func @kernel(%arg0: memref<1x2048xf32, #tpu.memory_space<any>>, %arg1: memref<1x2048xf32, #tpu.memory_space<any>>, %arg2: memref<1x!tpu.dma_semaphore, #tpu.memory_space<semaphore_mem>>) attributes {dimension_semantics = [], scalar_prefetch = 0 : i64, scratch_operands = 1 : i64, tpu.core_type = #tpu.core_type<tc>} {
    %c0_i32 = arith.constant 0 : i32
    %c0_i32_0 = arith.constant 0 : i32
    %c0_i32_1 = arith.constant 0 : i32
    %0 = tpu.memref_slice %arg0[%c0_i32_0, %c0_i32_1] : memref<1x2048xf32, #tpu.memory_space<any>> -> memref<1x2048xf32, #tpu.memory_space<any>>
    %c0_i32_2 = arith.constant 0 : i32
    %c0_i32_3 = arith.constant 0 : i32
    %1 = tpu.memref_slice %arg1[%c0_i32_2, %c0_i32_3] : memref<1x2048xf32, #tpu.memory_space<any>> -> memref<1x2048xf32, #tpu.memory_space<any>>
    %2 = tpu.memref_slice %arg2[%c0_i32] : memref<1x!tpu.dma_semaphore, #tpu.memory_space<semaphore_mem>> -> memref<1x!tpu.dma_semaphore, #tpu.memory_space<semaphore_mem>>
    %3 = tpu.memref_squeeze %2 : memref<1x!tpu.dma_semaphore, #tpu.memory_space<semaphore_mem>> -> memref<!tpu.dma_semaphore, #tpu.memory_space<semaphore_mem>>
    tpu.enqueue_dma source(%0 : memref<1x2048xf32, #tpu.memory_space<any>>) target(%1 : memref<1x2048xf32, #tpu.memory_space<any>>) target_semaphore(%3 : memref<!tpu.dma_semaphore, #tpu.memory_space<semaphore_mem>>)
    %c0_i32_4 = arith.constant 0 : i32
    %c0_i32_5 = arith.constant 0 : i32
    %c0_i32_6 = arith.constant 0 : i32
    %4 = tpu.memref_slice %arg0[%c0_i32_5, %c0_i32_6] : memref<1x2048xf32, #tpu.memory_space<any>> -> memref<1x2048xf32, #tpu.memory_space<any>>
    %c0_i32_7 = arith.constant 0 : i32
    %c0_i32_8 = arith.constant 0 : i32
    %5 = tpu.memref_slice %arg1[%c0_i32_7, %c0_i32_8] : memref<1x2048xf32, #tpu.memory_space<any>> -> memref<1x2048xf32, #tpu.memory_space<any>>
    %6 = tpu.memref_slice %arg2[%c0_i32_4] : memref<1x!tpu.dma_semaphore, #tpu.memory_space<semaphore_mem>> -> memref<1x!tpu.dma_semaphore, #tpu.memory_space<semaphore_mem>>
    %7 = tpu.memref_squeeze %6 : memref<1x!tpu.dma_semaphore, #tpu.memory_space<semaphore_mem>> -> memref<!tpu.dma_semaphore, #tpu.memory_space<semaphore_mem>>
    tpu.wait_dma2 semaphore(%7 : memref<!tpu.dma_semaphore, #tpu.memory_space<semaphore_mem>>) src(%4 : memref<1x2048xf32, #tpu.memory_space<any>>) dst(%5 : memref<1x2048xf32, #tpu.memory_space<any>>)
    return
  }
}

</mosaic_0001>

<llo_original>
// kernel: tpu_custom_call.1
$region0: #{tpu_custom_call.1}
  #allocation0 [shape = 'u32[]', space=smem, size = 0x4, offset = 0x4, fixed_abs, tag = 'smem constant byte address 0x4 - core index']
  #allocation1 [shape = 'u32[144,128]{1,0:T(1,128)}', space=vmem, size = 0x12000, scoped, tag = 'internal scratch']
  #allocation2 [shape = 's32[1]{0}', space=sflag, size = 0x4, scoped, tag = 'scratch operand']
  #allocation3 [shape = 's32[]', space=sflag, size = 0x4, offset = 0, fixed_abs, tag = 'sflag constant byte address 0x0 - dummy sync flag']
  #allocation4 [shape = 'u32[0]{0}', space=smem, size = 0, offset = 0, fixed_abs, tag = 'smem constant byte address 0x0 - null']
  %s0 = inlined_call_operand.hbm [shape: f32[1,2048], index: 0, kind: input, shape index: {}]
  %s1 = inlined_call_operand.hbm [shape: f32[1,2048], index: 1, kind: output, shape index: {}]
  %s2 = sld [smem:[#allocation0]]
  $region2: #{tpu_custom_call.1} parent=0
    _
  %s4 = ssub.s32 1, %s2
  %s5 = scalar_select 0, %s4, %s2
  %s7 = sshll.u32 1, 14
  %s8 = sxor.u32 4294967295, %s7
  %s11 = sshll.u32 3, 24
  %s12 = sxor.u32 4294967295, %s11
  %s13 = sand.u32 0, %s12
  %s15 = sor.u32 %s13, 0
  %18 = dma.general %s0, 256, %s1, [#allocation2], [#allocation3], [#allocation4], %s15, 0
  %s19 = smul.u32 1, 16
  %s20 = sshll.u32 %s19, 4
  %21 = dma.done [#allocation2], %s20
  %22 = vsyncmov [#allocation2]
  %s23 = vpop.sfrf %22
  %p24 = scmp.eq.s32.totalorder %s23, 0
  %p25 = pneg %p24
  %27 = shalt.err (%p25)

</llo_original>
